<compile_context>
chip_gen: v7x
topology: tpu7x:2x2x1
jax: 0.10.0
libtpu: 0.0.40
codegen_flags: <defaults>
</compile_context>

<pallas_src>
import functools
import itertools

import jax
import jax.numpy as jnp
from jax import lax
from jax.experimental import pallas as pl
from jax.experimental.pallas import tpu as pltpu


# ---------------------------------------------------------------------------
# Basis construction (parameter setup glue, plain JAX)
# ---------------------------------------------------------------------------
def _hermite_poly(n, x):
    """Physicists' Hermite polynomial H_n(x) via recurrence."""
    h_prev = jnp.ones_like(x)
    if n == 0:
        return h_prev
    h_cur = 2.0 * x
    for k in range(2, n + 1):
        h_prev, h_cur = h_cur, 2.0 * x * h_cur - 2.0 * (k - 1) * h_prev
    return h_cur


def steerable_basis(kernel_size, scales, effective_size):
    # TODO(synk): original repo's steerable_basis() source was not provided; this builds a
    # deterministic Hermite-Gaussian basis with the same shape (num_funcs, S, k, k, k),
    # num_funcs = effective_size ** 3 (basis_type='single' path).
    k = kernel_size
    coords = jnp.arange(k, dtype=jnp.float32) - (k - 1) / 2.0
    per_scale_1d = []
    for s in scales:
        u = coords / s
        g = jnp.exp(-0.5 * u * u) / s
        per_scale_1d.append((u, g))
    funcs = []
    for (nx, ny, nz) in itertools.product(range(effective_size), repeat=3):
        per_scale = []
        for (u, g) in per_scale_1d:
            fx = _hermite_poly(nx, u) * g
            fy = _hermite_poly(ny, u) * g
            fz = _hermite_poly(nz, u) * g
            per_scale.append(fx[:, None, None] * fy[None, :, None] * fz[None, None, :])
        funcs.append(jnp.stack(per_scale, axis=0))
    return jnp.stack(funcs, axis=0)            # (num_funcs, num_scales, k, k, k)


def normalize_basis_by_min_scale(basis, scales):
    idx = int(min(range(len(scales)), key=lambda i: scales[i]))
    norm = jnp.sqrt(jnp.sum(basis[:, idx] ** 2, axis=(-3, -2, -1)))
    return basis / norm[:, None, None, None, None]


# ---------------------------------------------------------------------------
# Pallas conv3d (the hot path)
# ---------------------------------------------------------------------------
def _round_up(x, m):
    return ((x + m - 1) // m) * m


def _triple(v):
    if isinstance(v, int):
        return (v, v, v)
    t = tuple(int(e) for e in v)
    return t if len(t) == 3 else (t[0],) * 3


def _ses_tile_kernel(x_ref, w_ref, o_ref, patch_ref, *, ci, tn, offsets):
    # x_ref    : (1, 1, Ci, TNH) bf16 -- halo'd tile of the flattened padded volume
    # w_ref    : (CoS, Ci*T)     bf16 -- tap-folded weights, VMEM resident (constant block)
    # o_ref    : (1, CoS, TN)    f32  -- lane-dense output tile (written once, no accumulator)
    # patch_ref: (Ci*T, TN)      bf16 -- im2col patch assembled in VMEM (dense contraction dim)
    xw = x_ref[0, 0]                                   # (Ci, TNH)
    for t, off in enumerate(offsets):                  # static, unrolled (T = K^3 taps)
        patch_ref[t * ci:(t + 1) * ci, :] = xw[:, off:off + tn]
    # Single big MXU matmul: contraction depth Ci*T, bf16 operands, f32 accumulate.
    o_ref[0] = jnp.dot(w_ref[...], patch_ref[...],
                       preferred_element_type=jnp.float32)


def conv3d_pallas(x, kernel, stride, padding):
    """3-D conv; NCDHW input, OIDHW kernel; returns (B, Cout, Do, Ho, Wo).

    Evaluated as a 'shifted flat matmul' over the zero-padded volume: every
    kernel tap becomes a constant offset along one flattened axis, the few
    invalid (boundary/pad) columns are discarded afterwards.  stride > 1 is
    handled by subsampling the stride-1 result.
    """
    sd, sh, sw = stride
    pd, ph, pw = padding
    B, Ci, D, H, W = x.shape
    CoS, Ci_k, K, K2, K3 = kernel.shape
    assert Ci == Ci_k and K == K2 == K3
    T = K * K * K

    xp = jnp.pad(x, ((0, 0), (0, 0), (pd, pd), (ph, ph), (pw, pw)))
    Dp, Hp, Wp = D + 2 * pd, H + 2 * ph, W + 2 * pw
    Do1, Ho1, Wo1 = Dp - K + 1, Hp - K + 1, Wp - K + 1      # stride-1 output dims
    assert Do1 > 0 and Ho1 > 0 and Wo1 > 0

    P = Dp * Hp * Wp
    offsets = [kd * Hp * Wp + kh * Wp + kw
               for kd in range(K) for kh in range(K) for kw in range(K)]
    max_off = offsets[-1]

    # Lane-dense tile along the flattened output axis (multiple of 128).  Kept
    # moderate so (2x input tile + patch + 2x output tile) stays well inside the
    # scoped VMEM budget, including v7x's smaller 64 MiB VMEM.
    TN = 512
    for cand in (4096, 2048, 1024):
        if P >= 2 * cand:
            TN = cand
            break
    Qpad = _round_up(P, TN)
    n_tiles = Qpad // TN
    TNH = TN + _round_up(max_off, 128)        # tile + halo covering all tap shifts

    # bf16 operands; f32 accumulation happens inside the kernel.
    x_flat = xp.reshape(B, Ci, P).astype(jnp.bfloat16)
    L = (n_tiles - 1) * TN + TNH
    x_flat = jnp.pad(x_flat, ((0, 0), (0, 0), (0, L - P)))
    # Overlapping "tile + halo" windows (only ~TNH/TN x input bytes, not 27x im2col).
    idx = jnp.arange(n_tiles)[:, None] * TN + jnp.arange(TNH)[None, :]
    x_tiles = jnp.transpose(jnp.take(x_flat, idx, axis=2), (0, 2, 1, 3))  # (B, n_tiles, Ci, TNH)

    # Tap-folded weights: row order (tap-major, channel-minor) matches the patch.
    w2 = jnp.transpose(kernel.reshape(CoS, Ci, T), (0, 2, 1))
    w2 = w2.reshape(CoS, T * Ci).astype(jnp.bfloat16)

    kern_fn = functools.partial(_ses_tile_kernel, ci=Ci, tn=TN, offsets=offsets)
    out_flat = pl.pallas_call(
        kern_fn,
        out_shape=jax.ShapeDtypeStruct((B, CoS, Qpad), jnp.float32),
        grid_spec=pltpu.PrefetchScalarGridSpec(
            num_scalar_prefetch=0,
            grid=(B, n_tiles),
            in_specs=[
                pl.BlockSpec((1, 1, Ci, TNH), lambda b, n: (b, n, 0, 0)),
                pl.BlockSpec((CoS, T * Ci), lambda b, n: (0, 0)),   # resident, DMA'd once
            ],
            out_specs=pl.BlockSpec((1, CoS, TN), lambda b, n: (b, 0, n)),
            scratch_shapes=[pltpu.VMEM((T * Ci, TN), jnp.bfloat16)],
        ),
        compiler_params=pltpu.CompilerParams(
            dimension_semantics=("parallel", "parallel")),
    )(x_tiles, w2)

    y = out_flat[:, :, :P].reshape(B, CoS, Dp, Hp, Wp)
    y = y[:, :, :Do1, :Ho1, :Wo1]
    if (sd, sh, sw) != (1, 1, 1):
        # TODO(synk): stride > 1 is computed at stride 1 and subsampled (extra compute
        # ~ sd*sh*sw); SESN layers use stride=1 by default.
        y = y[:, :, ::sd, ::sh, ::sw]
    return y


# ---------------------------------------------------------------------------
# SESConv_Z3_H forward
# ---------------------------------------------------------------------------
def _compose_kernel(weight, basis, out_channels, in_channels, kernel_size,
                    num_scales):
    F = basis.shape[0]
    kern = weight.reshape(out_channels * in_channels, F) @ basis.reshape(F, -1)
    kern = kern.reshape(out_channels, in_channels, num_scales,
                        kernel_size, kernel_size, kernel_size)
    kern = jnp.transpose(kern, (0, 2, 1, 3, 4, 5))
    return kern.reshape(out_channels * num_scales, in_channels,
                        kernel_size, kernel_size, kernel_size)


def ses_conv_z3_h_forward(x, weight, basis, *, out_channels, in_channels,
                          kernel_size, num_scales, stride=1, padding=0,
                          bias=None):
    # TODO(synk): transposed=True (conv_transpose3d) path not implemented; this is the
    # default transposed=False forward.
    kern = _compose_kernel(weight, basis, out_channels, in_channels,
                           kernel_size, num_scales)
    y = conv3d_pallas(x, kern, _triple(stride), _triple(padding))   # (B, Co*S, Do, Ho, Wo)
    B, _, d, h, w = y.shape
    y = y.reshape(B, out_channels, num_scales, d, h, w)
    if bias is not None:
        y = y + bias.reshape(1, -1, 1, 1, 1, 1)
    return y


if __name__ == "__main__":
    key = jax.random.PRNGKey(0)
    in_channels, out_channels = 4, 4
    kernel_size, effective_size = 3, 2
    scales = [1.0, 1.5]
    stride, padding = (1, 1, 1), (1, 1, 1)
    num_scales = len(scales)
    num_funcs = effective_size ** 3

    basis = normalize_basis_by_min_scale(
        steerable_basis(kernel_size, scales, effective_size), scales)

    # kaiming_uniform_(a=sqrt(5)) on (Co, Ci, F): bound = 1 / sqrt(Ci * F)
    k_w, k_x = jax.random.split(key)
    bound = 1.0 / float((in_channels * num_funcs) ** 0.5)
    weight = jax.random.uniform(k_w, (out_channels, in_channels, num_funcs),
                                jnp.float32, minval=-bound, maxval=bound)

    B, D, H, W = 2, 8, 8, 8
    x = jax.random.normal(k_x, (B, in_channels, D, H, W), jnp.float32)

    y = ses_conv_z3_h_forward(
        x, weight, basis, out_channels=out_channels, in_channels=in_channels,
        kernel_size=kernel_size, num_scales=num_scales,
        stride=stride, padding=padding, bias=None)
    y = jax.block_until_ready(y)

    # Pure-JAX reference (XLA conv3d) with the SAME bf16 operand quantization
    # and f32 accumulation, so the check isolates the Pallas structure.
    kern = _compose_kernel(weight, basis, out_channels, in_channels,
                           kernel_size, num_scales)
    y_ref = lax.conv_general_dilated(
        x.astype(jnp.bfloat16), kern.astype(jnp.bfloat16),
        window_strides=stride, padding=[(p, p) for p in padding],
        dimension_numbers=("NCDHW", "OIDHW", "NCDHW"),
        preferred_element_type=jnp.float32)
    y_ref = y_ref.reshape(B, out_channels, num_scales, *y_ref.shape[2:])

    assert y.shape == (B, out_channels, num_scales, D, H, W), y.shape
    err = float(jnp.max(jnp.abs(y - y_ref)))
    if not err < 1e-2:
        raise AssertionError(f"mismatch vs reference, max abs err = {err}")
    print("KERNEL_OK")
</pallas_src>

<mosaic_0001>
module attributes {stable_mosaic.version = 11 : i64} {
  func.func @_ses_tile_kernel(%arg0: i32, %arg1: i32, %arg2: memref<1x1x4x768xbf16, #tpu.memory_space<vmem>>, %arg3: memref<8x108xbf16, #tpu.memory_space<vmem>>, %arg4: memref<1x8x512xf32, #tpu.memory_space<vmem>>, %arg5: memref<108x512xbf16, #tpu.memory_space<vmem>>) attributes {dimension_semantics = [#tpu.dimension_semantics<parallel>, #tpu.dimension_semantics<parallel>], iteration_bounds = array<i64: 2, 2>, scalar_prefetch = 0 : i64, scratch_operands = 1 : i64, tpu.core_type = #tpu.core_type<tc>, window_params = [{transform_indices = @transform_0, window_bounds = array<i64: 1, 1, 4, 768>}, {pipeline_mode = #tpu.pipeline_mode<synchronous>, transform_indices = @transform_1, window_bounds = array<i64: 8, 108>}, {transform_indices = @transform_2, window_bounds = array<i64: 1, 8, 512>}]} {
    %c0 = arith.constant 0 : index
    %c0_0 = arith.constant 0 : index
    %c0_1 = arith.constant 0 : index
    %c0_2 = arith.constant 0 : index
    %0 = vector.load %arg2[%c0, %c0_0, %c0_1, %c0_2] : memref<1x1x4x768xbf16, #tpu.memory_space<vmem>>, vector<1x1x4x768xbf16>
    %1 = vector.shape_cast %0 : vector<1x1x4x768xbf16> to vector<4x768xbf16>
    %2 = vector.extract_strided_slice %1 {offsets = [0, 0], sizes = [4, 512], strides = [1, 1]} : vector<4x768xbf16> to vector<4x512xbf16>
    %c0_3 = arith.constant 0 : index
    %c0_4 = arith.constant 0 : index
    %3 = vector.load %arg5[%c0_3, %c0_4] : memref<108x512xbf16, #tpu.memory_space<vmem>>, vector<4x512xbf16>
    tpu.vector_store %arg5[%c0_3, %c0_4], %2 {strides = array<i32>} : memref<108x512xbf16, #tpu.memory_space<vmem>>, vector<4x512xbf16>,
    %4 = vector.extract_strided_slice %1 {offsets = [0, 1], sizes = [4, 512], strides = [1, 1]} : vector<4x768xbf16> to vector<4x512xbf16>
    %c4 = arith.constant 4 : index
    %c0_5 = arith.constant 0 : index
    %5 = vector.load %arg5[%c4, %c0_5] : memref<108x512xbf16, #tpu.memory_space<vmem>>, vector<4x512xbf16>
    tpu.vector_store %arg5[%c4, %c0_5], %4 {strides = array<i32>} : memref<108x512xbf16, #tpu.memory_space<vmem>>, vector<4x512xbf16>,
    %6 = vector.extract_strided_slice %1 {offsets = [0, 2], sizes = [4, 512], strides = [1, 1]} : vector<4x768xbf16> to vector<4x512xbf16>
    %c8 = arith.constant 8 : index
    %c0_6 = arith.constant 0 : index
    %7 = vector.load %arg5[%c8, %c0_6] : memref<108x512xbf16, #tpu.memory_space<vmem>>, vector<4x512xbf16>
    tpu.vector_store %arg5[%c8, %c0_6], %6 {strides = array<i32>} : memref<108x512xbf16, #tpu.memory_space<vmem>>, vector<4x512xbf16>,
    %8 = vector.extract_strided_slice %1 {offsets = [0, 10], sizes = [4, 512], strides = [1, 1]} : vector<4x768xbf16> to vector<4x512xbf16>
    %c12 = arith.constant 12 : index
    %c0_7 = arith.constant 0 : index
    %9 = vector.load %arg5[%c12, %c0_7] : memref<108x512xbf16, #tpu.memory_space<vmem>>, vector<4x512xbf16>
    tpu.vector_store %arg5[%c12, %c0_7], %8 {strides = array<i32>} : memref<108x512xbf16, #tpu.memory_space<vmem>>, vector<4x512xbf16>,
    %10 = vector.extract_strided_slice %1 {offsets = [0, 11], sizes = [4, 512], strides = [1, 1]} : vector<4x768xbf16> to vector<4x512xbf16>
    %c16 = arith.constant 16 : index
    %c0_8 = arith.constant 0 : index
    %11 = vector.load %arg5[%c16, %c0_8] : memref<108x512xbf16, #tpu.memory_space<vmem>>, vector<4x512xbf16>
    tpu.vector_store %arg5[%c16, %c0_8], %10 {strides = array<i32>} : memref<108x512xbf16, #tpu.memory_space<vmem>>, vector<4x512xbf16>,
    %12 = vector.extract_strided_slice %1 {offsets = [0, 12], sizes = [4, 512], strides = [1, 1]} : vector<4x768xbf16> to vector<4x512xbf16>
    %c20 = arith.constant 20 : index
    %c0_9 = arith.constant 0 : index
    %13 = vector.load %arg5[%c20, %c0_9] : memref<108x512xbf16, #tpu.memory_space<vmem>>, vector<4x512xbf16>
    tpu.vector_store %arg5[%c20, %c0_9], %12 {strides = array<i32>} : memref<108x512xbf16, #tpu.memory_space<vmem>>, vector<4x512xbf16>,
    %14 = vector.extract_strided_slice %1 {offsets = [0, 20], sizes = [4, 512], strides = [1, 1]} : vector<4x768xbf16> to vector<4x512xbf16>
    %c24 = arith.constant 24 : index
    %c0_10 = arith.constant 0 : index
    %15 = vector.load %arg5[%c24, %c0_10] : memref<108x512xbf16, #tpu.memory_space<vmem>>, vector<4x512xbf16>
    tpu.vector_store %arg5[%c24, %c0_10], %14 {strides = array<i32>} : memref<108x512xbf16, #tpu.memory_space<vmem>>, vector<4x512xbf16>,
    %16 = vector.extract_strided_slice %1 {offsets = [0, 21], sizes = [4, 512], strides = [1, 1]} : vector<4x768xbf16> to vector<4x512xbf16>
    %c28 = arith.constant 28 : index
    %c0_11 = arith.constant 0 : index
    %17 = vector.load %arg5[%c28, %c0_11] : memref<108x512xbf16, #tpu.memory_space<vmem>>, vector<4x512xbf16>
    tpu.vector_store %arg5[%c28, %c0_11], %16 {strides = array<i32>} : memref<108x512xbf16, #tpu.memory_space<vmem>>, vector<4x512xbf16>,
    %18 = vector.extract_strided_slice %1 {offsets = [0, 22], sizes = [4, 512], strides = [1, 1]} : vector<4x768xbf16> to vector<4x512xbf16>
    %c32 = arith.constant 32 : index
    %c0_12 = arith.constant 0 : index
    %19 = vector.load %arg5[%c32, %c0_12] : memref<108x512xbf16, #tpu.memory_space<vmem>>, vector<4x512xbf16>
    tpu.vector_store %arg5[%c32, %c0_12], %18 {strides = array<i32>} : memref<108x512xbf16, #tpu.memory_space<vmem>>, vector<4x512xbf16>,
    %20 = vector.extract_strided_slice %1 {offsets = [0, 100], sizes = [4, 512], strides = [1, 1]} : vector<4x768xbf16> to vector<4x512xbf16>
    %c36 = arith.constant 36 : index
    %c0_13 = arith.constant 0 : index
    %21 = vector.load %arg5[%c36, %c0_13] : memref<108x512xbf16, #tpu.memory_space<vmem>>, vector<4x512xbf16>
    tpu.vector_store %arg5[%c36, %c0_13], %20 {strides = array<i32>} : memref<108x512xbf16, #tpu.memory_space<vmem>>, vector<4x512xbf16>,
    %22 = vector.extract_strided_slice %1 {offsets = [0, 101], sizes = [4, 512], strides = [1, 1]} : vector<4x768xbf16> to vector<4x512xbf16>
    %c40 = arith.constant 40 : index
    %c0_14 = arith.constant 0 : index
    %23 = vector.load %arg5[%c40, %c0_14] : memref<108x512xbf16, #tpu.memory_space<vmem>>, vector<4x512xbf16>
    tpu.vector_store %arg5[%c40, %c0_14], %22 {strides = array<i32>} : memref<108x512xbf16, #tpu.memory_space<vmem>>, vector<4x512xbf16>,
    %24 = vector.extract_strided_slice %1 {offsets = [0, 102], sizes = [4, 512], strides = [1, 1]} : vector<4x768xbf16> to vector<4x512xbf16>
    %c44 = arith.constant 44 : index
    %c0_15 = arith.constant 0 : index
    %25 = vector.load %arg5[%c44, %c0_15] : memref<108x512xbf16, #tpu.memory_space<vmem>>, vector<4x512xbf16>
    tpu.vector_store %arg5[%c44, %c0_15], %24 {strides = array<i32>} : memref<108x512xbf16, #tpu.memory_space<vmem>>, vector<4x512xbf16>,
    %26 = vector.extract_strided_slice %1 {offsets = [0, 110], sizes = [4, 512], strides = [1, 1]} : vector<4x768xbf16> to vector<4x512xbf16>
    %c48 = arith.constant 48 : index
    %c0_16 = arith.constant 0 : index
    %27 = vector.load %arg5[%c48, %c0_16] : memref<108x512xbf16, #tpu.memory_space<vmem>>, vector<4x512xbf16>
    tpu.vector_store %arg5[%c48, %c0_16], %26 {strides = array<i32>} : memref<108x512xbf16, #tpu.memory_space<vmem>>, vector<4x512xbf16>,
    %28 = vector.extract_strided_slice %1 {offsets = [0, 111], sizes = [4, 512], strides = [1, 1]} : vector<4x768xbf16> to vector<4x512xbf16>
    %c52 = arith.constant 52 : index
    %c0_17 = arith.constant 0 : index
    %29 = vector.load %arg5[%c52, %c0_17] : memref<108x512xbf16, #tpu.memory_space<vmem>>, vector<4x512xbf16>
    tpu.vector_store %arg5[%c52, %c0_17], %28 {strides = array<i32>} : memref<108x512xbf16, #tpu.memory_space<vmem>>, vector<4x512xbf16>,
    %30 = vector.extract_strided_slice %1 {offsets = [0, 112], sizes = [4, 512], strides = [1, 1]} : vector<4x768xbf16> to vector<4x512xbf16>
    %c56 = arith.constant 56 : index
    %c0_18 = arith.constant 0 : index
    %31 = vector.load %arg5[%c56, %c0_18] : memref<108x512xbf16, #tpu.memory_space<vmem>>, vector<4x512xbf16>
    tpu.vector_store %arg5[%c56, %c0_18], %30 {strides = array<i32>} : memref<108x512xbf16, #tpu.memory_space<vmem>>, vector<4x512xbf16>,
    %32 = vector.extract_strided_slice %1 {offsets = [0, 120], sizes = [4, 512], strides = [1, 1]} : vector<4x768xbf16> to vector<4x512xbf16>
    %c60 = arith.constant 60 : index
    %c0_19 = arith.constant 0 : index
    %33 = vector.load %arg5[%c60, %c0_19] : memref<108x512xbf16, #tpu.memory_space<vmem>>, vector<4x512xbf16>
    tpu.vector_store %arg5[%c60, %c0_19], %32 {strides = array<i32>} : memref<108x512xbf16, #tpu.memory_space<vmem>>, vector<4x512xbf16>,
    %34 = vector.extract_strided_slice %1 {offsets = [0, 121], sizes = [4, 512], strides = [1, 1]} : vector<4x768xbf16> to vector<4x512xbf16>
    %c64 = arith.constant 64 : index
    %c0_20 = arith.constant 0 : index
    %35 = vector.load %arg5[%c64, %c0_20] : memref<108x512xbf16, #tpu.memory_space<vmem>>, vector<4x512xbf16>
    tpu.vector_store %arg5[%c64, %c0_20], %34 {strides = array<i32>} : memref<108x512xbf16, #tpu.memory_space<vmem>>, vector<4x512xbf16>,
    %36 = vector.extract_strided_slice %1 {offsets = [0, 122], sizes = [4, 512], strides = [1, 1]} : vector<4x768xbf16> to vector<4x512xbf16>
    %c68 = arith.constant 68 : index
    %c0_21 = arith.constant 0 : index
    %37 = vector.load %arg5[%c68, %c0_21] : memref<108x512xbf16, #tpu.memory_space<vmem>>, vector<4x512xbf16>
    tpu.vector_store %arg5[%c68, %c0_21], %36 {strides = array<i32>} : memref<108x512xbf16, #tpu.memory_space<vmem>>, vector<4x512xbf16>,
    %38 = vector.extract_strided_slice %1 {offsets = [0, 200], sizes = [4, 512], strides = [1, 1]} : vector<4x768xbf16> to vector<4x512xbf16>
    %c72 = arith.constant 72 : index
    %c0_22 = arith.constant 0 : index
    %39 = vector.load %arg5[%c72, %c0_22] : memref<108x512xbf16, #tpu.memory_space<vmem>>, vector<4x512xbf16>
    tpu.vector_store %arg5[%c72, %c0_22], %38 {strides = array<i32>} : memref<108x512xbf16, #tpu.memory_space<vmem>>, vector<4x512xbf16>,
    %40 = vector.extract_strided_slice %1 {offsets = [0, 201], sizes = [4, 512], strides = [1, 1]} : vector<4x768xbf16> to vector<4x512xbf16>
    %c76 = arith.constant 76 : index
    %c0_23 = arith.constant 0 : index
    %41 = vector.load %arg5[%c76, %c0_23] : memref<108x512xbf16, #tpu.memory_space<vmem>>, vector<4x512xbf16>
    tpu.vector_store %arg5[%c76, %c0_23], %40 {strides = array<i32>} : memref<108x512xbf16, #tpu.memory_space<vmem>>, vector<4x512xbf16>,
    %42 = vector.extract_strided_slice %1 {offsets = [0, 202], sizes = [4, 512], strides = [1, 1]} : vector<4x768xbf16> to vector<4x512xbf16>
    %c80 = arith.constant 80 : index
    %c0_24 = arith.constant 0 : index
    %43 = vector.load %arg5[%c80, %c0_24] : memref<108x512xbf16, #tpu.memory_space<vmem>>, vector<4x512xbf16>
    tpu.vector_store %arg5[%c80, %c0_24], %42 {strides = array<i32>} : memref<108x512xbf16, #tpu.memory_space<vmem>>, vector<4x512xbf16>,
    %44 = vector.extract_strided_slice %1 {offsets = [0, 210], sizes = [4, 512], strides = [1, 1]} : vector<4x768xbf16> to vector<4x512xbf16>
    %c84 = arith.constant 84 : index
    %c0_25 = arith.constant 0 : index
    %45 = vector.load %arg5[%c84, %c0_25] : memref<108x512xbf16, #tpu.memory_space<vmem>>, vector<4x512xbf16>
    tpu.vector_store %arg5[%c84, %c0_25], %44 {strides = array<i32>} : memref<108x512xbf16, #tpu.memory_space<vmem>>, vector<4x512xbf16>,
    %46 = vector.extract_strided_slice %1 {offsets = [0, 211], sizes = [4, 512], strides = [1, 1]} : vector<4x768xbf16> to vector<4x512xbf16>
    %c88 = arith.constant 88 : index
    %c0_26 = arith.constant 0 : index
    %47 = vector.load %arg5[%c88, %c0_26] : memref<108x512xbf16, #tpu.memory_space<vmem>>, vector<4x512xbf16>
    tpu.vector_store %arg5[%c88, %c0_26], %46 {strides = array<i32>} : memref<108x512xbf16, #tpu.memory_space<vmem>>, vector<4x512xbf16>,
    %48 = vector.extract_strided_slice %1 {offsets = [0, 212], sizes = [4, 512], strides = [1, 1]} : vector<4x768xbf16> to vector<4x512xbf16>
    %c92 = arith.constant 92 : index
    %c0_27 = arith.constant 0 : index
    %49 = vector.load %arg5[%c92, %c0_27] : memref<108x512xbf16, #tpu.memory_space<vmem>>, vector<4x512xbf16>
    tpu.vector_store %arg5[%c92, %c0_27], %48 {strides = array<i32>} : memref<108x512xbf16, #tpu.memory_space<vmem>>, vector<4x512xbf16>,
    %50 = vector.extract_strided_slice %1 {offsets = [0, 220], sizes = [4, 512], strides = [1, 1]} : vector<4x768xbf16> to vector<4x512xbf16>
    %c96 = arith.constant 96 : index
    %c0_28 = arith.constant 0 : index
    %51 = vector.load %arg5[%c96, %c0_28] : memref<108x512xbf16, #tpu.memory_space<vmem>>, vector<4x512xbf16>
    tpu.vector_store %arg5[%c96, %c0_28], %50 {strides = array<i32>} : memref<108x512xbf16, #tpu.memory_space<vmem>>, vector<4x512xbf16>,
    %52 = vector.extract_strided_slice %1 {offsets = [0, 221], sizes = [4, 512], strides = [1, 1]} : vector<4x768xbf16> to vector<4x512xbf16>
    %c100 = arith.constant 100 : index
    %c0_29 = arith.constant 0 : index
    %53 = vector.load %arg5[%c100, %c0_29] : memref<108x512xbf16, #tpu.memory_space<vmem>>, vector<4x512xbf16>
    tpu.vector_store %arg5[%c100, %c0_29], %52 {strides = array<i32>} : memref<108x512xbf16, #tpu.memory_space<vmem>>, vector<4x512xbf16>,
    %54 = vector.extract_strided_slice %1 {offsets = [0, 222], sizes = [4, 512], strides = [1, 1]} : vector<4x768xbf16> to vector<4x512xbf16>
    %c104 = arith.constant 104 : index
    %c0_30 = arith.constant 0 : index
    %55 = vector.load %arg5[%c104, %c0_30] : memref<108x512xbf16, #tpu.memory_space<vmem>>, vector<4x512xbf16>
    tpu.vector_store %arg5[%c104, %c0_30], %54 {strides = array<i32>} : memref<108x512xbf16, #tpu.memory_space<vmem>>, vector<4x512xbf16>,
    %c0_31 = arith.constant 0 : index
    %c0_32 = arith.constant 0 : index
    %56 = vector.load %arg3[%c0_31, %c0_32] : memref<8x108xbf16, #tpu.memory_space<vmem>>, vector<8x108xbf16>
    %c0_33 = arith.constant 0 : index
    %c0_34 = arith.constant 0 : index
    %57 = vector.load %arg5[%c0_33, %c0_34] : memref<108x512xbf16, #tpu.memory_space<vmem>>, vector<108x512xbf16>
    %cst = arith.constant dense<0.000000e+00> : vector<8x512xf32>
    %58 = tpu.matmul %56, %57, %cst {dimension_numbers = #tpu.dot_dimension_numbers<[1], [0], [0], [1], [0, 0, 1, 1], [], []>} : vector<8x108xbf16>, vector<108x512xbf16>, vector<8x512xf32> -> vector<8x512xf32>
    %c0_35 = arith.constant 0 : index
    %c0_36 = arith.constant 0 : index
    %c0_37 = arith.constant 0 : index
    %59 = vector.load %arg4[%c0_35, %c0_36, %c0_37] : memref<1x8x512xf32, #tpu.memory_space<vmem>>, vector<1x8x512xf32>
    %60 = vector.shape_cast %59 : vector<1x8x512xf32> to vector<8x512xf32>
    %61 = vector.shape_cast %58 : vector<8x512xf32> to vector<1x8x512xf32>
    tpu.vector_store %arg4[%c0_35, %c0_36, %c0_37], %61 {strides = array<i32>} : memref<1x8x512xf32, #tpu.memory_space<vmem>>, vector<1x8x512xf32>,
    return
  }
  func.func @transform_0(%arg0: i32, %arg1: i32) -> (i32, i32, i32, i32) {
    %c0_i32 = arith.constant 0 : i32
    %c0_i32_0 = arith.constant 0 : i32
    %c0_i32_1 = arith.constant 0 : i32
    return %arg0, %arg1, %c0_i32, %c0_i32_0 : i32, i32, i32, i32
  }
  func.func @transform_1(%arg0: i32, %arg1: i32) -> (i32, i32) {
    %c0_i32 = arith.constant 0 : i32
    %c0_i32_0 = arith.constant 0 : i32
    %c0_i32_1 = arith.constant 0 : i32
    return %c0_i32, %c0_i32_0 : i32, i32
  }
  func.func @transform_2(%arg0: i32, %arg1: i32) -> (i32, i32, i32) {
    %c0_i32 = arith.constant 0 : i32
    %c0_i32_0 = arith.constant 0 : i32
    return %arg0, %c0_i32, %arg1 : i32, i32, i32
  }
}

</mosaic_0001>

<llo_original>
// kernel: tpu_custom_call.1
$region0: #{tpu_custom_call.1}
  #allocation0 [shape = 'u32[]', space=smem, size = 0x4, offset = 0x4, fixed_abs, tag = 'smem constant byte address 0x4 - core index']
  #allocation1 [shape = 'u32[144,128]{1,0:T(1,128)}', space=vmem, size = 0x12000, scoped, tag = 'internal scratch']
  #allocation2 [shape = 'bf16[108,512]{1,0:T(8,128)(2,1)}', space=vmem, size = 0x1c000, scoped, tag = 'scratch operand']
  %s0 = inlined_call_operand.hbm [shape: bf16[2,2,4,768], index: 0, kind: input, shape index: {}]
  %s1 = inlined_call_operand.hbm [shape: bf16[8,108], index: 1, kind: input, shape index: {}]
  %s2 = inlined_call_operand.hbm [shape: f32[2,8,1024], index: 2, kind: output, shape index: {}]
  %s3 = sld [smem:[#allocation0]]
  $region49: #{tpu_custom_call.1} parent=0
    _
  %s5 = ssub.s32 1, %s3
  %s6 = scalar_select 0, %s5, %s3
  $region1: #{tpu_custom_call.1} parent=0
    #allocation3 [shape = 'u8[12288]{0}', space=vmem, size = 0x3000, scoped, tag = 'input window, operand 0']
    #allocation4 [shape = 's32[2]{0}', space=sflag, size = 0x8, scoped, tag = 'scoped memory for tpu_custom_call.1']
    #allocation5 [shape = 's32[2]{0}', space=sflag, size = 0x8, scoped, tag = 'scoped memory for tpu_custom_call.1']
    #allocation6 [shape = 'u8[2048]{0}', space=vmem, size = 0x800, scoped, tag = 'input window, operand 1, single buffered']
    #allocation7 [shape = 's32[1]{0}', space=sflag, size = 0x4, scoped, tag = 'scoped memory for tpu_custom_call.1']
    #allocation8 [shape = 'u8[32768]{0}', space=vmem, size = 0x8000, scoped, tag = 'output window, operand 0']
    %7 = vsyncpa [#allocation4], 0
    %s8 = scalar_lea.sflag [#allocation4], 1
    %9 = vsyncpa %s8, 0
    %10 = vsyncpa [#allocation7], 0
    %11 = vsyncpa [#allocation5], 0
    %s12 = scalar_lea.sflag [#allocation5], 1
    %13 = vsyncpa %s12, 0
    loop: start=0, step=1, limit=6
    $region2: #{tpu_custom_call.1} parent=1 // loop_pre_header
      _
    $region3: #{tpu_custom_call.1} parent=1 // loop_header
      %s15 = sphi 0, %s19
      %p16 = scmp.ge.s32.totalorder %s15, 6
      %s22 = sphi 0, %s34
      %s23 = sphi 0, %s30
      %s24 = sphi 0, %s22
      %s25 = sphi 0, %s23
      %s26 = sphi 0, %s24
      %s27 = sphi 0, %s25
      %s39 = sphi 0, %s41
      %s42 = sphi 0, %s39
      %s43 = sphi 0, %s42
      %s59 = sphi 0, %s43
      %s63 = sphi 0, %s63
      %s65 = sphi 0, %s63
      %s66 = sphi 0, %s65
      %s80 = sphi 0, %s66
      %s88 = sphi 0, %s90
      %s91 = sphi 0, %s88
      %s92 = sphi 0, %s91
      %s108 = sphi 0, %s92
    $region4: #{tpu_custom_call.1} parent=1 // loop_header_branch
      %18 = sbr.rel (%p16) target = $region8
    $region5: #{tpu_custom_call.1} parent=1 // loop_body
      %s20 = ssub.s32 %s15, 1
      %s21 = ssub.s32 %s15, 2
      %s28 = sadd.s32 1, %s23
      %p29 = scmp.ge.s32.totalorder %s28, 2
      %s30 = scalar_select %p29, 0, %s28
      %s31 = sadd.s32 1, %s22
      %s32 = scalar_select %p29, %s31, %s22
      %p33 = scmp.ge.s32.totalorder %s32, 2
      %s34 = scalar_select %p33, 0, %s32
      %s35 = ssub.s32 %s22, %s34
      %s36 = ssub.s32 %s23, %s30
      %s37 = sor.u32 %s35, %s36
      %p38 = scmp.eq.s32.totalorder %s37, 0
      %s40 = sadd.s32 %s39, 1
      %s41 = scalar_select %p38, %s39, %s40
      %p44 = pneg %p38
      %p45 = scmp.eq.s32.totalorder %s15, 3
      %p46 = por %p44, %p45
      %p47 = scmp.ne.s32.totalorder %s39, %s42
      %p48 = scmp.eq.s32.totalorder %s15, 0
      %p49 = por %p47, %p48
      %p50 = scmp.ne.s32.totalorder %s39, %s42
      %p51 = scmp.eq.s32.totalorder %s20, 3
      %p52 = por %p50, %p51
      %p53 = scmp.ne.s32.totalorder %s42, %s43
      %p54 = scmp.eq.s32.totalorder %s20, 0
      %p55 = por %p53, %p54
      %p56 = scmp.ne.s32.totalorder %s42, %s43
      %p57 = scmp.eq.s32.totalorder %s21, 3
      %p58 = por %p56, %p57
      %p60 = scmp.ne.s32.totalorder %s43, %s59
      %p61 = scmp.eq.s32.totalorder %s21, 0
      %p62 = por %p60, %p61
      %s64 = sadd.s32 %s63, 1
      %p67 = scmp.eq.s32.totalorder %s15, 3
      %p68 = scmp.ne.s32.totalorder %s63, %s65
      %p69 = scmp.eq.s32.totalorder %s15, 0
      %p70 = por %p68, %p69
      %p71 = scmp.ne.s32.totalorder %s63, %s65
      %p72 = scmp.eq.s32.totalorder %s20, 3
      %p73 = por %p71, %p72
      %p74 = scmp.ne.s32.totalorder %s65, %s66
      %p75 = scmp.eq.s32.totalorder %s20, 0
      %p76 = por %p74, %p75
      %p77 = scmp.ne.s32.totalorder %s65, %s66
      %p78 = scmp.eq.s32.totalorder %s21, 3
      %p79 = por %p77, %p78
      %p81 = scmp.ne.s32.totalorder %s66, %s80
      %p82 = scmp.eq.s32.totalorder %s21, 0
      %p83 = por %p81, %p82
      %s84 = ssub.s32 %s22, %s34
      %s85 = ssub.s32 %s23, %s30
      %s86 = sor.u32 %s84, %s85
      %p87 = scmp.eq.s32.totalorder %s86, 0
      %s89 = sadd.s32 %s88, 1
      %s90 = scalar_select %p87, %s88, %s89
      %p93 = pneg %p87
      %p94 = scmp.eq.s32.totalorder %s15, 3
      %p95 = por %p93, %p94
      %p96 = scmp.ne.s32.totalorder %s88, %s91
      %p97 = scmp.eq.s32.totalorder %s15, 0
      %p98 = por %p96, %p97
      %p99 = scmp.ne.s32.totalorder %s88, %s91
      %p100 = scmp.eq.s32.totalorder %s20, 3
      %p101 = por %p99, %p100
      %p102 = scmp.ne.s32.totalorder %s91, %s92
      %p103 = scmp.eq.s32.totalorder %s20, 0
      %p104 = por %p102, %p103
      %p105 = scmp.ne.s32.totalorder %s91, %s92
      %p106 = scmp.eq.s32.totalorder %s21, 3
      %p107 = por %p105, %p106
      %p109 = scmp.ne.s32.totalorder %s92, %s108
      %p110 = scmp.eq.s32.totalorder %s21, 0
      %p111 = por %p109, %p110
      %p112 = scmp.le.s32.totalorder 1, %s15
      %p113 = scmp.lt.s32.totalorder %s15, 5
      %p114 = pnand %p112, %p113
      %p115 = pneg %p114
      // Predicated region
      $region9: #{tpu_custom_call.1} parent=5 // pred_check
        _
      $region10: #{tpu_custom_call.1} parent=5 // pred_check_branch
        %117 = sbr.rel (%p114) target = $region12
      $region11: #{tpu_custom_call.1} parent=5 // pred_region
        %s118 = ssub.s32 %s15, 1
        // Predicated region
        $region13: #{tpu_custom_call.1} parent=11 // pred_check
          %p119 = pneg %p76
        $region14: #{tpu_custom_call.1} parent=11 // pred_check_branch
          %121 = sbr.rel (%p119) target = $region16
        $region15: #{tpu_custom_call.1} parent=11 // pred_region
          %s123 = ssub.s32 64, 64
          %124 = vsyncadd [#allocation7], %s123
          %s126 = sshll.u32 [#allocation6], 4
          %s127 = int_to_ptr.vmem [resolvable:$true] %s126
          %129 = dma.hbm_to_vmem [thread:$0]  %s1, 64, %s127, [#allocation7]
        $region16: #{tpu_custom_call.1} parent=11 // pred_fallthru
          _
      $region12: #{tpu_custom_call.1} parent=5 // pred_fallthru
        _
      %p130 = scmp.lt.s32.totalorder %s15, 4
      // Predicated region
      $region17: #{tpu_custom_call.1} parent=5 // pred_check
        %p131 = pneg %p130
      $region18: #{tpu_custom_call.1} parent=5 // pred_check_branch
        %133 = sbr.rel (%p131) target = $region20
      $region19: #{tpu_custom_call.1} parent=5 // pred_region
        // Predicated region
        $region21: #{tpu_custom_call.1} parent=19 // pred_check
          %p134 = pneg %p49
        $region22: #{tpu_custom_call.1} parent=19 // pred_check_branch
          %136 = sbr.rel (%p134) target = $region24
        $region23: #{tpu_custom_call.1} parent=19 // pred_region
          %s137 = sand.u32 %s39, 1
          %s138 = scalar_lea.sflag [#allocation4], %s137
          %s139 = sand.u32 %s39, 1
          %s140 = smul.addr %s139, 12
          %s141 = scalar_lea.vmem [#allocation3], %s140
          %s143 = ssub.s32 192, 192
          %144 = vsyncadd %s138, %s143
          %s145 = smul.addr %s23, 6
          %s146 = smul.addr %s22, 12
          %s147 = sadd.s32 %s145, %s146
          %s148 = smul.addr %s147, 32
          %s149 = scalar_lea.hbm %s0, %s148
          %s151 = sshll.u32 %s141, 4
          %s152 = int_to_ptr.vmem [resolvable:$true] %s151
          %154 = dma.hbm_to_vmem [thread:$0]  %s149, 192, %s152, %s138
        $region24: #{tpu_custom_call.1} parent=19 // pred_fallthru
          _
      $region20: #{tpu_custom_call.1} parent=5 // pred_fallthru
        _
      %p155 = scmp.le.s32.totalorder 1, %s15
      %p156 = scmp.lt.s32.totalorder %s15, 5
      %p157 = pnand %p155, %p156
      %p158 = pneg %p157
      // Predicated region
      $region25: #{tpu_custom_call.1} parent=5 // pred_check
        _
      $region26: #{tpu_custom_call.1} parent=5 // pred_check_branch
        %160 = sbr.rel (%p157) target = $region28
      $region27: #{tpu_custom_call.1} parent=5 // pred_region
        %s161 = ssub.s32 %s15, 1
        %s162 = sand.u32 %s42, 1
        %s163 = scalar_lea.sflag [#allocation4], %s162
        %s164 = sand.u32 %s42, 1
        %s165 = smul.addr %s164, 12
        %s166 = scalar_lea.vmem [#allocation3], %s165
        // Predicated region
        $region29: #{tpu_custom_call.1} parent=27 // pred_check
          %p167 = pneg %p55
        $region30: #{tpu_custom_call.1} parent=27 // pred_check_branch
          %169 = sbr.rel (%p167) target = $region32
        $region31: #{tpu_custom_call.1} parent=27 // pred_region
          %170 = dma.done %s163, 192
        $region32: #{tpu_custom_call.1} parent=27 // pred_fallthru
          _
        // Predicated region
        $region33: #{tpu_custom_call.1} parent=27 // pred_check
          %p171 = pneg %p76
        $region34: #{tpu_custom_call.1} parent=27 // pred_check_branch
          %173 = sbr.rel (%p171) target = $region36
        $region35: #{tpu_custom_call.1} parent=27 // pred_region
          %174 = dma.done [#allocation7], 64
        $region36: #{tpu_custom_call.1} parent=27 // pred_fallthru
          _
        %s175 = sand.u32 %s42, 1
        %s176 = scalar_lea.sflag [#allocation4], %s175
        %s177 = sand.u32 %s42, 1
        %s178 = smul.addr %s177, 12
        %s179 = scalar_lea.vmem [#allocation3], %s178
        %p180 = pneg %p55
        %p181 = pneg %p52
        %p182 = pneg %p76
        %p183 = pneg %p73
        %p184 = pneg %p104
        %p185 = pneg %p101
        %s186 = sand.u32 %s91, 1
        %s187 = scalar_lea.sflag [#allocation5], %s186
        %s188 = sand.u32 %s91, 1
        %s189 = smul.addr %s188, 32
        %s190 = scalar_lea.vmem [#allocation8], %s189
        %s191 = smul.u32 4, %s25
        %v193 = vld [vmem:[%s166] sm:$0xff]
        %v194 = vld [vmem:[%s166 + $0x8] sm:$0xf]
        %v196 = vcombine.high %v193, %v193
        %v198 = vunpack.c.l.s4 1983009808
        %v199 = vunpack.c.0.s8 %v198
        %v200 = vlaneseq
        %v201 = vshrl.u32 %v200, 7
        %v202 = vsub.s32 %v199, %v201
        %v203 = vrot.slane %v193, %v202
        %v205 = vunpack.c.l.s4 1983009808
        %v206 = vunpack.c.0.s8 %v205
        %v207 = vlaneseq
        %v208 = vshrl.u32 %v207, 7
        %v209 = vsub.s32 %v206, %v208
        %v210 = vrot.slane %v196, %v209
        %213 = vst [vmem:[#allocation2] sm:$0x33] %v203
        %214 = vst [vmem:[#allocation2 + $0x8] sm:$0x33] %v210
        %v216 = vcombine.low %v193, %v193
        %v218 = vunpack.c.l.s4 1983009808
        %v219 = vunpack.c.0.s8 %v218
        %v220 = vlaneseq
        %v221 = vshrl.u32 %v220, 7
        %v222 = vsub.s32 %v219, %v221
        %v223 = vrot.slane %v216, %v222
        %v224 = vcombine.low %v194, %v194
        %v226 = vunpack.c.l.s4 1983009808
        %v227 = vunpack.c.0.s8 %v226
        %v228 = vlaneseq
        %v229 = vshrl.u32 %v228, 7
        %v230 = vsub.s32 %v227, %v229
        %v231 = vrot.slane %v224, %v230
        %232 = vrot.lane.b32.xlu0 %v223, 127
        %v233 = vpop.permute.xlu0 %232
        %234 = vrot.lane.b32.xlu0 %v203, 127
        %v235 = vpop.permute.xlu0 %234
        %236 = vrot.lane.b32.xlu0 %v231, 127
        %v237 = vpop.permute.xlu0 %236
        %v238 = vrot.slane %v233, 4
        %v239 = vrot.slane %v235, 4
        %v240 = vrot.slane %v237, 4
        %vm241 = vcmask 1043456
        %v242 = vsel %vm241, %v238, %v239
        %vm243 = vcmask 1039360
        %v244 = vsel %vm243, %v233, %v242
        %v245 = vsel %vm241, %v239, %v240
        %v246 = vsel %vm243, %v235, %v245
        %249 = vst [vmem:[#allocation2] sm:$0xcc] %v244
        %250 = vst [vmem:[#allocation2 + $0x8] sm:$0xcc] %v246
        %v252 = vunpack.c.l.s4 1983009808
        %v253 = vunpack.c.0.s8 %v252
        %v254 = vlaneseq
        %v255 = vshrl.u32 %v254, 7
        %v256 = vsub.s32 %v253, %v255
        %v257 = vrot.slane %v194, %v256
        %258 = vrot.lane.b32.xlu0 %v203, 126
        %v259 = vpop.permute.xlu0 %258
        %260 = vrot.lane.b32.xlu0 %v210, 126
        %v261 = vpop.permute.xlu0 %260
        %262 = vrot.lane.b32.xlu0 %v257, 126
        %v263 = vpop.permute.xlu0 %262
        %v264 = vrot.slane %v259, 4
        %v265 = vrot.slane %v261, 4
        %v266 = vrot.slane %v263, 4
        %v267 = vsel %vm241, %v264, %v265
        %vm268 = vcmask 1031168
        %v269 = vsel %vm268, %v259, %v267
        %v270 = vsel %vm241, %v265, %v266
        %v271 = vsel %vm268, %v261, %v270
        %274 = vst [vmem:[#allocation2 + $0x10] sm:$0x33] %v269
        %275 = vst [vmem:[#allocation2 + $0x18] sm:$0x33] %v271
        %276 = vrot.lane.b32.xlu0 %v223, 118
        %v277 = vpop.permute.xlu0 %276
        %278 = vrot.lane.b32.xlu0 %v203, 118
        %v279 = vpop.permute.xlu0 %278
        %280 = vrot.lane.b32.xlu0 %v231, 118
        %v281 = vpop.permute.xlu0 %280
        %v282 = vrot.slane %v277, 4
        %v283 = vrot.slane %v279, 4
        %v284 = vrot.slane %v281, 4
        %v285 = vsel %vm241, %v282, %v283
        %vm286 = vcmask 965632
        %v287 = vsel %vm286, %v277, %v285
        %v288 = vsel %vm241, %v283, %v284
        %v289 = vsel %vm286, %v279, %v288
        %292 = vst [vmem:[#allocation2 + $0x10] sm:$0xcc] %v287
        %293 = vst [vmem:[#allocation2 + $0x18] sm:$0xcc] %v289
        %294 = vrot.lane.b32.xlu0 %v203, 117
        %v295 = vpop.permute.xlu0 %294
        %296 = vrot.lane.b32.xlu0 %v210, 117
        %v297 = vpop.permute.xlu0 %296
        %298 = vrot.lane.b32.xlu0 %v257, 117
        %v299 = vpop.permute.xlu0 %298
        %v300 = vrot.slane %v295, 4
        %v301 = vrot.slane %v297, 4
        %v302 = vrot.slane %v299, 4
        %v303 = vsel %vm241, %v300, %v301
        %vm304 = vcmask 957440
        %v305 = vsel %vm304, %v295, %v303
        %v306 = vsel %vm241, %v301, %v302
        %v307 = vsel %vm304, %v297, %v306
        %310 = vst [vmem:[#allocation2 + $0x20] sm:$0x33] %v305
        %311 = vst [vmem:[#allocation2 + $0x28] sm:$0x33] %v307
        %312 = vrot.lane.b32.xlu0 %v223, 116
        %v313 = vpop.permute.xlu0 %312
        %314 = vrot.lane.b32.xlu0 %v203, 116
        %v315 = vpop.permute.xlu0 %314
        %316 = vrot.lane.b32.xlu0 %v231, 116
        %v317 = vpop.permute.xlu0 %316
        %v318 = vrot.slane %v313, 4
        %v319 = vrot.slane %v315, 4
        %v320 = vrot.slane %v317, 4
        %v321 = vsel %vm241, %v318, %v319
        %vm322 = vcmask 949248
        %v323 = vsel %vm322, %v313, %v321
        %v324 = vsel %vm241, %v319, %v320
        %v325 = vsel %vm322, %v315, %v324
        %328 = vst [vmem:[#allocation2 + $0x20] sm:$0xcc] %v323
        %329 = vst [vmem:[#allocation2 + $0x28] sm:$0xcc] %v325
        %330 = vrot.lane.b32.xlu0 %v203, 108
        %v331 = vpop.permute.xlu0 %330
        %332 = vrot.lane.b32.xlu0 %v210, 108
        %v333 = vpop.permute.xlu0 %332
        %334 = vrot.lane.b32.xlu0 %v257, 108
        %v335 = vpop.permute.xlu0 %334
        %v336 = vrot.slane %v331, 4
        %v337 = vrot.slane %v333, 4
        %v338 = vrot.slane %v335, 4
        %v339 = vsel %vm241, %v336, %v337
        %vm340 = vcmask 883712
        %v341 = vsel %vm340, %v331, %v339
        %v342 = vsel %vm241, %v337, %v338
        %v343 = vsel %vm340, %v333, %v342
        %346 = vst [vmem:[#allocation2 + $0x30] sm:$0x33] %v341
        %347 = vst [vmem:[#allocation2 + $0x38] sm:$0x33] %v343
        %348 = vrot.lane.b32.xlu0 %v223, 107
        %v349 = vpop.permute.xlu0 %348
        %350 = vrot.lane.b32.xlu0 %v203, 107
        %v351 = vpop.permute.xlu0 %350
        %352 = vrot.lane.b32.xlu0 %v231, 107
        %v353 = vpop.permute.xlu0 %352
        %v354 = vrot.slane %v349, 4
        %v355 = vrot.slane %v351, 4
        %v356 = vrot.slane %v353, 4
        %v357 = vsel %vm241, %v354, %v355
        %vm358 = vcmask 875520
        %v359 = vsel %vm358, %v349, %v357
        %v360 = vsel %vm241, %v355, %v356
        %v361 = vsel %vm358, %v351, %v360
        %364 = vst [vmem:[#allocation2 + $0x30] sm:$0xcc] %v359
        %365 = vst [vmem:[#allocation2 + $0x38] sm:$0xcc] %v361
        %366 = vrot.lane.b32.xlu0 %v203, 106
        %v367 = vpop.permute.xlu0 %366
        %368 = vrot.lane.b32.xlu0 %v210, 106
        %v369 = vpop.permute.xlu0 %368
        %370 = vrot.lane.b32.xlu0 %v257, 106
        %v371 = vpop.permute.xlu0 %370
        %v372 = vrot.slane %v367, 4
        %v373 = vrot.slane %v369, 4
        %v374 = vrot.slane %v371, 4
        %v375 = vsel %vm241, %v372, %v373
        %vm376 = vcmask 867328
        %v377 = vsel %vm376, %v367, %v375
        %v378 = vsel %vm241, %v373, %v374
        %v379 = vsel %vm376, %v369, %v378
        %382 = vst [vmem:[#allocation2 + $0x40] sm:$0x33] %v377
        %383 = vst [vmem:[#allocation2 + $0x48] sm:$0x33] %v379
        %384 = vrot.lane.b32.xlu0 %v223, 28
        %v385 = vpop.permute.xlu0 %384
        %386 = vrot.lane.b32.xlu0 %v203, 28
        %v387 = vpop.permute.xlu0 %386
        %388 = vrot.lane.b32.xlu0 %v231, 28
        %v389 = vpop.permute.xlu0 %388
        %v390 = vrot.slane %v385, 4
        %v391 = vrot.slane %v387, 4
        %v392 = vrot.slane %v389, 4
        %v393 = vsel %vm241, %v390, %v391
        %vm394 = vcmask 228352
        %v395 = vsel %vm394, %v385, %v393
        %v396 = vsel %vm241, %v391, %v392
        %v397 = vsel %vm394, %v387, %v396
        %400 = vst [vmem:[#allocation2 + $0x40] sm:$0xcc] %v395
        %401 = vst [vmem:[#allocation2 + $0x48] sm:$0xcc] %v397
        %402 = vrot.lane.b32.xlu0 %v203, 27
        %v403 = vpop.permute.xlu0 %402
        %404 = vrot.lane.b32.xlu0 %v210, 27
        %v405 = vpop.permute.xlu0 %404
        %406 = vrot.lane.b32.xlu0 %v257, 27
        %v407 = vpop.permute.xlu0 %406
        %v408 = vrot.slane %v403, 4
        %v409 = vrot.slane %v405, 4
        %v410 = vrot.slane %v407, 4
        %v411 = vsel %vm241, %v408, %v409
        %vm412 = vcmask 220160
        %v413 = vsel %vm412, %v403, %v411
        %v414 = vsel %vm241, %v409, %v410
        %v415 = vsel %vm412, %v405, %v414
        %418 = vst [vmem:[#allocation2 + $0x50] sm:$0x33] %v413
        %419 = vst [vmem:[#allocation2 + $0x58] sm:$0x33] %v415
        %420 = vrot.lane.b32.xlu0 %v223, 26
        %v421 = vpop.permute.xlu0 %420
        %422 = vrot.lane.b32.xlu0 %v203, 26
        %v423 = vpop.permute.xlu0 %422
        %424 = vrot.lane.b32.xlu0 %v231, 26
        %v425 = vpop.permute.xlu0 %424
        %v426 = vrot.slane %v421, 4
        %v427 = vrot.slane %v423, 4
        %v428 = vrot.slane %v425, 4
        %v429 = vsel %vm241, %v426, %v427
        %vm430 = vcmask 211968
        %v431 = vsel %vm430, %v421, %v429
        %v432 = vsel %vm241, %v427, %v428
        %v433 = vsel %vm430, %v423, %v432
        %436 = vst [vmem:[#allocation2 + $0x50] sm:$0xcc] %v431
        %437 = vst [vmem:[#allocation2 + $0x58] sm:$0xcc] %v433
        %438 = vrot.lane.b32.xlu0 %v203, 18
        %v439 = vpop.permute.xlu0 %438
        %440 = vrot.lane.b32.xlu0 %v210, 18
        %v441 = vpop.permute.xlu0 %440
        %442 = vrot.lane.b32.xlu0 %v257, 18
        %v443 = vpop.permute.xlu0 %442
        %v444 = vrot.slane %v439, 4
        %v445 = vrot.slane %v441, 4
        %v446 = vrot.slane %v443, 4
        %v447 = vsel %vm241, %v444, %v445
        %vm448 = vcmask 146432
        %v449 = vsel %vm448, %v439, %v447
        %v450 = vsel %vm241, %v445, %v446
        %v451 = vsel %vm448, %v441, %v450
        %454 = vst [vmem:[#allocation2 + $0x60] sm:$0x33] %v449
        %455 = vst [vmem:[#allocation2 + $0x68] sm:$0x33] %v451
        %456 = vrot.lane.b32.xlu0 %v223, 17
        %v457 = vpop.permute.xlu0 %456
        %458 = vrot.lane.b32.xlu0 %v203, 17
        %v459 = vpop.permute.xlu0 %458
        %460 = vrot.lane.b32.xlu0 %v231, 17
        %v461 = vpop.permute.xlu0 %460
        %v462 = vrot.slane %v457, 4
        %v463 = vrot.slane %v459, 4
        %v464 = vrot.slane %v461, 4
        %v465 = vsel %vm241, %v462, %v463
        %vm466 = vcmask 138240
        %v467 = vsel %vm466, %v457, %v465
        %v468 = vsel %vm241, %v463, %v464
        %v469 = vsel %vm466, %v459, %v468
        %472 = vst [vmem:[#allocation2 + $0x60] sm:$0xcc] %v467
        %473 = vst [vmem:[#allocation2 + $0x68] sm:$0xcc] %v469
        %474 = vrot.lane.b32.xlu0 %v203, 16
        %v475 = vpop.permute.xlu0 %474
        %476 = vrot.lane.b32.xlu0 %v210, 16
        %v477 = vpop.permute.xlu0 %476
        %478 = vrot.lane.b32.xlu0 %v257, 16
        %v479 = vpop.permute.xlu0 %478
        %v480 = vrot.slane %v475, 4
        %v481 = vrot.slane %v477, 4
        %v482 = vrot.slane %v479, 4
        %v483 = vsel %vm241, %v480, %v481
        %vm484 = vcmask 130048
        %v485 = vsel %vm484, %v475, %v483
        %v486 = vsel %vm241, %v481, %v482
        %v487 = vsel %vm484, %v477, %v486
        %490 = vst [vmem:[#allocation2 + $0x70] sm:$0x33] %v485
        %491 = vst [vmem:[#allocation2 + $0x78] sm:$0x33] %v487
        %492 = vrot.lane.b32.xlu0 %v223, 8
        %v493 = vpop.permute.xlu0 %492
        %494 = vrot.lane.b32.xlu0 %v203, 8
        %v495 = vpop.permute.xlu0 %494
        %496 = vrot.lane.b32.xlu0 %v231, 8
        %v497 = vpop.permute.xlu0 %496
        %v498 = vrot.slane %v493, 4
        %v499 = vrot.slane %v495, 4
        %v500 = vrot.slane %v497, 4
        %v501 = vsel %vm241, %v498, %v499
        %vm502 = vcmask 64512
        %v503 = vsel %vm502, %v493, %v501
        %v504 = vsel %vm241, %v499, %v500
        %v505 = vsel %vm502, %v495, %v504
        %508 = vst [vmem:[#allocation2 + $0x70] sm:$0xcc] %v503
        %509 = vst [vmem:[#allocation2 + $0x78] sm:$0xcc] %v505
        %510 = vrot.lane.b32.xlu0 %v203, 7
        %v511 = vpop.permute.xlu0 %510
        %512 = vrot.lane.b32.xlu0 %v210, 7
        %v513 = vpop.permute.xlu0 %512
        %514 = vrot.lane.b32.xlu0 %v257, 7
        %v515 = vpop.permute.xlu0 %514
        %v516 = vrot.slane %v511, 4
        %v517 = vrot.slane %v513, 4
        %v518 = vrot.slane %v515, 4
        %v519 = vsel %vm241, %v516, %v517
        %vm520 = vcmask 56320
        %v521 = vsel %vm520, %v511, %v519
        %v522 = vsel %vm241, %v517, %v518
        %v523 = vsel %vm520, %v513, %v522
        %526 = vst [vmem:[#allocation2 + $0x80] sm:$0x33] %v521
        %527 = vst [vmem:[#allocation2 + $0x88] sm:$0x33] %v523
        %528 = vrot.lane.b32.xlu0 %v223, 6
        %v529 = vpop.permute.xlu0 %528
        %530 = vrot.lane.b32.xlu0 %v203, 6
        %v531 = vpop.permute.xlu0 %530
        %532 = vrot.lane.b32.xlu0 %v231, 6
        %v533 = vpop.permute.xlu0 %532
        %v534 = vrot.slane %v529, 4
        %v535 = vrot.slane %v531, 4
        %v536 = vrot.slane %v533, 4
        %v537 = vsel %vm241, %v534, %v535
        %vm538 = vcmask 48128
        %v539 = vsel %vm538, %v529, %v537
        %v540 = vsel %vm241, %v535, %v536
        %v541 = vsel %vm538, %v531, %v540
        %544 = vst [vmem:[#allocation2 + $0x80] sm:$0xcc] %v539
        %545 = vst [vmem:[#allocation2 + $0x88] sm:$0xcc] %v541
        %546 = vrot.lane.b32.xlu0 %v203, 56
        %v547 = vpop.permute.xlu0 %546
        %548 = vrot.lane.b32.xlu0 %v210, 56
        %v549 = vpop.permute.xlu0 %548
        %550 = vrot.lane.b32.xlu0 %v257, 56
        %v551 = vpop.permute.xlu0 %550
        %v552 = vrot.slane %v547, 4
        %v553 = vrot.slane %v549, 4
        %v554 = vrot.slane %v551, 4
        %v555 = vsel %vm241, %v552, %v553
        %vm556 = vcmask 457728
        %v557 = vsel %vm556, %v555, %v549
        %v558 = vsel %vm241, %v553, %v554
        %v559 = vsel %vm556, %v558, %v551
        %562 = vst [vmem:[#allocation2 + $0x90] sm:$0x33] %v557
        %563 = vst [vmem:[#allocation2 + $0x98] sm:$0x33] %v559
        %564 = vrot.lane.b32.xlu0 %v223, 55
        %v565 = vpop.permute.xlu0 %564
        %566 = vrot.lane.b32.xlu0 %v203, 55
        %v567 = vpop.permute.xlu0 %566
        %568 = vrot.lane.b32.xlu0 %v231, 55
        %v569 = vpop.permute.xlu0 %568
        %v570 = vrot.slane %v565, 4
        %v571 = vrot.slane %v567, 4
        %v572 = vrot.slane %v569, 4
        %v573 = vsel %vm241, %v570, %v571
        %vm574 = vcmask 449536
        %v575 = vsel %vm574, %v573, %v567
        %v576 = vsel %vm241, %v571, %v572
        %v577 = vsel %vm574, %v576, %v569
        %580 = vst [vmem:[#allocation2 + $0x90] sm:$0xcc] %v575
        %581 = vst [vmem:[#allocation2 + $0x98] sm:$0xcc] %v577
        %582 = vrot.lane.b32.xlu0 %v203, 54
        %v583 = vpop.permute.xlu0 %582
        %584 = vrot.lane.b32.xlu0 %v210, 54
        %v585 = vpop.permute.xlu0 %584
        %586 = vrot.lane.b32.xlu0 %v257, 54
        %v587 = vpop.permute.xlu0 %586
        %v588 = vrot.slane %v583, 4
        %v589 = vrot.slane %v585, 4
        %v590 = vrot.slane %v587, 4
        %v591 = vsel %vm241, %v588, %v589
        %vm592 = vcmask 441344
        %v593 = vsel %vm592, %v591, %v585
        %v594 = vsel %vm241, %v589, %v590
        %v595 = vsel %vm592, %v594, %v587
        %598 = vst [vmem:[#allocation2 + $0xa0] sm:$0x33] %v593
        %599 = vst [vmem:[#allocation2 + $0xa8] sm:$0x33] %v595
        %600 = vrot.lane.b32.xlu0 %v223, 46
        %v601 = vpop.permute.xlu0 %600
        %602 = vrot.lane.b32.xlu0 %v203, 46
        %v603 = vpop.permute.xlu0 %602
        %604 = vrot.lane.b32.xlu0 %v231, 46
        %v605 = vpop.permute.xlu0 %604
        %v606 = vrot.slane %v601, 4
        %v607 = vrot.slane %v603, 4
        %v608 = vrot.slane %v605, 4
        %v609 = vsel %vm241, %v606, %v607
        %vm610 = vcmask 375808
        %v611 = vsel %vm610, %v609, %v603
        %v612 = vsel %vm241, %v607, %v608
        %v613 = vsel %vm610, %v612, %v605
        %616 = vst [vmem:[#allocation2 + $0xa0] sm:$0xcc] %v611
        %617 = vst [vmem:[#allocation2 + $0xa8] sm:$0xcc] %v613
        %618 = vrot.lane.b32.xlu0 %v203, 45
        %v619 = vpop.permute.xlu0 %618
        %620 = vrot.lane.b32.xlu0 %v210, 45
        %v621 = vpop.permute.xlu0 %620
        %622 = vrot.lane.b32.xlu0 %v257, 45
        %v623 = vpop.permute.xlu0 %622
        %v624 = vrot.slane %v619, 4
        %v625 = vrot.slane %v621, 4
        %v626 = vrot.slane %v623, 4
        %v627 = vsel %vm241, %v624, %v625
        %vm628 = vcmask 367616
        %v629 = vsel %vm628, %v627, %v621
        %v630 = vsel %vm241, %v625, %v626
        %v631 = vsel %vm628, %v630, %v623
        %634 = vst [vmem:[#allocation2 + $0xb0] sm:$0x33] %v629
        %635 = vst [vmem:[#allocation2 + $0xb8] sm:$0x33] %v631
        %636 = vrot.lane.b32.xlu0 %v223, 44
        %v637 = vpop.permute.xlu0 %636
        %638 = vrot.lane.b32.xlu0 %v203, 44
        %v639 = vpop.permute.xlu0 %638
        %640 = vrot.lane.b32.xlu0 %v231, 44
        %v641 = vpop.permute.xlu0 %640
        %v642 = vrot.slane %v637, 4
        %v643 = vrot.slane %v639, 4
        %v644 = vrot.slane %v641, 4
        %v645 = vsel %vm241, %v642, %v643
        %vm646 = vcmask 359424
        %v647 = vsel %vm646, %v645, %v639
        %v648 = vsel %vm241, %v643, %v644
        %v649 = vsel %vm646, %v648, %v641
        %652 = vst [vmem:[#allocation2 + $0xb0] sm:$0xcc] %v647
        %653 = vst [vmem:[#allocation2 + $0xb8] sm:$0xcc] %v649
        %654 = vrot.lane.b32.xlu0 %v203, 36
        %v655 = vpop.permute.xlu0 %654
        %656 = vrot.lane.b32.xlu0 %v210, 36
        %v657 = vpop.permute.xlu0 %656
        %658 = vrot.lane.b32.xlu0 %v257, 36
        %v659 = vpop.permute.xlu0 %658
        %v660 = vrot.slane %v655, 4
        %v661 = vrot.slane %v657, 4
        %v662 = vrot.slane %v659, 4
        %v663 = vsel %vm241, %v660, %v661
        %vm664 = vcmask 293888
        %v665 = vsel %vm664, %v663, %v657
        %v666 = vsel %vm241, %v661, %v662
        %v667 = vsel %vm664, %v666, %v659
        %670 = vst [vmem:[#allocation2 + $0xc0] sm:$0x33] %v665
        %671 = vst [vmem:[#allocation2 + $0xc8] sm:$0x33] %v667
        %672 = vrot.lane.b32.xlu0 %v223, 35
        %v673 = vpop.permute.xlu0 %672
        %674 = vrot.lane.b32.xlu0 %v203, 35
        %v675 = vpop.permute.xlu0 %674
        %676 = vrot.lane.b32.xlu0 %v231, 35
        %v677 = vpop.permute.xlu0 %676
        %v678 = vrot.slane %v673, 4
        %v679 = vrot.slane %v675, 4
        %v680 = vrot.slane %v677, 4
        %v681 = vsel %vm241, %v678, %v679
        %vm682 = vcmask 285696
        %v683 = vsel %vm682, %v681, %v675
        %v684 = vsel %vm241, %v679, %v680
        %v685 = vsel %vm682, %v684, %v677
        %688 = vst [vmem:[#allocation2 + $0xc0] sm:$0xcc] %v683
        %689 = vst [vmem:[#allocation2 + $0xc8] sm:$0xcc] %v685
        %690 = vrot.lane.b32.xlu0 %v203, 34
        %v691 = vpop.permute.xlu0 %690
        %692 = vrot.lane.b32.xlu0 %v210, 34
        %v693 = vpop.permute.xlu0 %692
        %694 = vrot.lane.b32.xlu0 %v257, 34
        %v695 = vpop.permute.xlu0 %694
        %v696 = vrot.slane %v691, 4
        %v697 = vrot.slane %v693, 4
        %v698 = vrot.slane %v695, 4
        %v699 = vsel %vm241, %v696, %v697
        %vm700 = vcmask 277504
        %v701 = vsel %vm700, %v699, %v693
        %v702 = vsel %vm241, %v697, %v698
        %v703 = vsel %vm700, %v702, %v695
        %706 = vst [vmem:[#allocation2 + $0xd0] sm:$0x33] %v701
        %707 = vst [vmem:[#allocation2 + $0xd8] sm:$0x33] %v703
        %v708 = vld [vmem:[#allocation6] sm:$0xf]
        %v709 = vld [vmem:[#allocation2] sm:$0xff]
        %v710 = vld [vmem:[#allocation2 + $0x8] sm:$0xff]
        %v711 = vld [vmem:[#allocation2 + $0x10] sm:$0xff]
        %v712 = vld [vmem:[#allocation2 + $0x18] sm:$0xff]
        %v713 = vld [vmem:[#allocation2 + $0x20] sm:$0xff]
        %v714 = vld [vmem:[#allocation2 + $0x28] sm:$0xff]
        %v715 = vld [vmem:[#allocation2 + $0x30] sm:$0xff]
        %v716 = vld [vmem:[#allocation2 + $0x38] sm:$0xff]
        %v717 = vld [vmem:[#allocation2 + $0x40] sm:$0xff]
        %v718 = vld [vmem:[#allocation2 + $0x48] sm:$0xff]
        %v719 = vld [vmem:[#allocation2 + $0x50] sm:$0xff]
        %v720 = vld [vmem:[#allocation2 + $0x58] sm:$0xff]
        %v721 = vld [vmem:[#allocation2 + $0x60] sm:$0xff]
        %v722 = vld [vmem:[#allocation2 + $0x68] sm:$0xff]
        %v723 = vld [vmem:[#allocation2 + $0x70] sm:$0xff]
        %v724 = vld [vmem:[#allocation2 + $0x78] sm:$0xff]
        %v725 = vld [vmem:[#allocation2 + $0x80] sm:$0xff]
        %v726 = vld [vmem:[#allocation2 + $0x88] sm:$0xff]
        %v727 = vld [vmem:[#allocation2 + $0x90] sm:$0xff]
        %v728 = vld [vmem:[#allocation2 + $0x98] sm:$0xff]
        %v729 = vld [vmem:[#allocation2 + $0xa0] sm:$0xff]
        %v730 = vld [vmem:[#allocation2 + $0xa8] sm:$0xff]
        %v731 = vld [vmem:[#allocation2 + $0xb0] sm:$0xff]
        %v732 = vld [vmem:[#allocation2 + $0xb8] sm:$0xff]
        %v733 = vld [vmem:[#allocation2 + $0xc0] sm:$0xff]
        %v734 = vld [vmem:[#allocation2 + $0xc8] sm:$0xff]
        %v735 = vld [vmem:[#allocation2 + $0xd0] sm:$0x33]
        %v736 = vld [vmem:[#allocation2 + $0xd8] sm:$0x33]
        %v765 = vunpack.c.l.b16 %v709
        %v766 = vunpack.c.h.b16 %v709
        %v767 = vunpack.c.l.b16 %v710
        %v768 = vunpack.c.h.b16 %v710
        %v769 = vunpack.c.l.b16 %v711
        %v770 = vunpack.c.h.b16 %v711
        %v771 = vunpack.c.l.b16 %v712
        %v772 = vunpack.c.h.b16 %v712
        %v773 = vunpack.c.l.b16 %v713
        %v774 = vunpack.c.h.b16 %v713
        %v775 = vunpack.c.l.b16 %v714
        %v776 = vunpack.c.h.b16 %v714
        %v777 = vunpack.c.l.b16 %v715
        %v778 = vunpack.c.h.b16 %v715
        %v779 = vunpack.c.l.b16 %v716
        %v780 = vunpack.c.h.b16 %v716
        %v781 = vunpack.c.l.b16 %v717
        %v782 = vunpack.c.h.b16 %v717
        %v783 = vunpack.c.l.b16 %v718
        %v784 = vunpack.c.h.b16 %v718
        %v785 = vunpack.c.l.b16 %v719
        %v786 = vunpack.c.h.b16 %v719
        %v787 = vunpack.c.l.b16 %v720
        %v788 = vunpack.c.h.b16 %v720
        %v789 = vunpack.c.l.b16 %v721
        %v790 = vunpack.c.h.b16 %v721
        %v791 = vunpack.c.l.b16 %v722
        %v792 = vunpack.c.h.b16 %v722
        %v793 = vunpack.c.l.b16 %v723
        %v794 = vunpack.c.h.b16 %v723
        %v795 = vunpack.c.l.b16 %v724
        %v796 = vunpack.c.h.b16 %v724
        %v797 = vunpack.c.l.b16 %v725
        %v798 = vunpack.c.h.b16 %v725
        %v799 = vunpack.c.l.b16 %v726
        %v800 = vunpack.c.h.b16 %v726
        %v801 = vunpack.c.l.b16 %v727
        %v802 = vunpack.c.h.b16 %v727
        %v803 = vunpack.c.l.b16 %v728
        %v804 = vunpack.c.h.b16 %v728
        %v805 = vunpack.c.l.b16 %v729
        %v806 = vunpack.c.h.b16 %v729
        %v807 = vunpack.c.l.b16 %v730
        %v808 = vunpack.c.h.b16 %v730
        %v809 = vunpack.c.l.b16 %v731
        %v810 = vunpack.c.h.b16 %v731
        %v811 = vunpack.c.l.b16 %v732
        %v812 = vunpack.c.h.b16 %v732
        %v813 = vunpack.c.l.b16 %v733
        %v814 = vunpack.c.h.b16 %v733
        %v815 = vunpack.c.l.b16 %v734
        %v816 = vunpack.c.h.b16 %v734
        %v817 = vunpack.c.l.b16 %v735
        %v818 = vunpack.c.h.b16 %v735
        %v819 = vunpack.c.l.b16 %v736
        %v820 = vunpack.c.h.b16 %v736
        %v821 = vpack.c.b16 %v769, %v765
        %v822 = vpack.c.b16 %v770, %v766
        %v823 = vpack.c.b16 %v771, %v767
        %v824 = vpack.c.b16 %v772, %v768
        %v825 = vpack.c.b16 %v777, %v773
        %v826 = vpack.c.b16 %v778, %v774
        %v827 = vpack.c.b16 %v779, %v775
        %v828 = vpack.c.b16 %v780, %v776
        %v829 = vpack.c.b16 %v785, %v781
        %v830 = vpack.c.b16 %v786, %v782
        %v831 = vpack.c.b16 %v787, %v783
        %v832 = vpack.c.b16 %v788, %v784
        %v833 = vpack.c.b16 %v793, %v789
        %v834 = vpack.c.b16 %v794, %v790
        %v835 = vpack.c.b16 %v795, %v791
        %v836 = vpack.c.b16 %v796, %v792
        %v837 = vpack.c.b16 %v801, %v797
        %v838 = vpack.c.b16 %v802, %v798
        %v839 = vpack.c.b16 %v803, %v799
        %v840 = vpack.c.b16 %v804, %v800
        %v841 = vpack.c.b16 %v809, %v805
        %v842 = vpack.c.b16 %v810, %v806
        %v843 = vpack.c.b16 %v811, %v807
        %v844 = vpack.c.b16 %v812, %v808
        %v845 = vpack.c.b16 %v817, %v813
        %v846 = vpack.c.b16 %v818, %v814
        %v847 = vpack.c.b16 %v819, %v815
        %v848 = vpack.c.b16 %v820, %v816
        %vm873 = vcmask 883712
        %v875 = vsel %vm873, %v708, 0
        %vm877 = vcmask 1045504
        %v879 = vsel %vm877, %v845, 0
        %v882 = vsel %vm877, %v846, 0
        %v885 = vsel %vm877, %v847, 0
        %v888 = vsel %vm877, %v848, 0
        %890 = vmatprep.subr.bf16.mxu0 %v822
        %891 = vmatpush1.bf16.msra.mxu0 %v821
        %892 = vmatprep.subr.bf16.mxu0 %v826
        %893 = vmatpush1.bf16.msra.mxu0 %v825
        %894 = vmatprep.subr.bf16.mxu0 %v830
        %895 = vmatpush1.bf16.msra.mxu0 %v829
        %896 = vmatprep.subr.bf16.mxu0 %v834
        %897 = vmatpush1.bf16.msra.mxu0 %v833
        %898 = vmatprep.subr.bf16.mxu0 %v838
        %899 = vmatpush1.bf16.msra.mxu0 %v837
        %900 = vmatprep.subr.bf16.mxu0 %v842
        %901 = vmatpush1.bf16.msra.mxu0 %v841
        %902 = vmatprep.subr.bf16.mxu0 %v882
        %903 = vmatpush1.bf16.msra.mxu0 %v879
        %904 = vmatprep.subr.bf16.mxu0 0
        %905 = vmatpush1.bf16.msra.mxu0 0
        %906 = vmatprep.subr.bf16.mxu0 0
        %907 = vmatpush1.bf16.msra.mxu0 0
        %908 = vmatprep.subr.bf16.mxu0 0
        %909 = vmatpush1.bf16.msra.mxu0 0
        %910 = vmatprep.subr.bf16.mxu0 0
        %911 = vmatpush1.bf16.msra.mxu0 0
        %912 = vmatprep.subr.bf16.mxu0 0
        %913 = vmatpush1.bf16.msra.mxu0 0
        %914 = vmatprep.subr.bf16.mxu0 0
        %915 = vmatpush1.bf16.msra.mxu0 0
        %916 = vmatprep.subr.bf16.mxu0 0
        %917 = vmatpush1.bf16.msra.mxu0 0
        %918 = vmatprep.subr.bf16.mxu0 0
        %919 = vmatpush1.bf16.msra.mxu0 0
        %920 = vmatprep.subr.bf16.mxu0 0
        %921 = vmatpush1.bf16.msra.mxu0 0
        %922 = vmatprep.mubr.bf16.mxu0 0
        %923 = vmatmul.mubr.bf16.gmra.mrb[0].mxu0 %v875
        %v924 = vpop.f32.mrb[0].mxu0
        %v925 = vadd.f32 0.0, %v924
        %v926 = vpop.f32.mrb[0].mxu0
        %v927 = vadd.f32 0.0, %v926
        %v928 = vpop.f32.mrb[0].mxu0
        %v929 = vpop.f32.mrb[0].mxu0
        %930 = vdwg.mxu0
        %931 = vmatprep.subr.bf16.mxu0 %v824
        %932 = vmatpush1.bf16.msra.mxu0 %v823
        %933 = vmatprep.subr.bf16.mxu0 %v828
        %934 = vmatpush1.bf16.msra.mxu0 %v827
        %935 = vmatprep.subr.bf16.mxu0 %v832
        %936 = vmatpush1.bf16.msra.mxu0 %v831
        %937 = vmatprep.subr.bf16.mxu0 %v836
        %938 = vmatpush1.bf16.msra.mxu0 %v835
        %939 = vmatprep.subr.bf16.mxu0 %v840
        %940 = vmatpush1.bf16.msra.mxu0 %v839
        %941 = vmatprep.subr.bf16.mxu0 %v844
        %942 = vmatpush1.bf16.msra.mxu0 %v843
        %943 = vmatprep.subr.bf16.mxu0 %v888
        %944 = vmatpush1.bf16.msra.mxu0 %v885
        %945 = vmatprep.subr.bf16.mxu0 0
        %946 = vmatpush1.bf16.msra.mxu0 0
        %947 = vmatprep.subr.bf16.mxu0 0
        %948 = vmatpush1.bf16.msra.mxu0 0
        %949 = vmatprep.subr.bf16.mxu0 0
        %950 = vmatpush1.bf16.msra.mxu0 0
        %951 = vmatprep.subr.bf16.mxu0 0
        %952 = vmatpush1.bf16.msra.mxu0 0
        %953 = vmatprep.subr.bf16.mxu0 0
        %954 = vmatpush1.bf16.msra.mxu0 0
        %955 = vmatprep.subr.bf16.mxu0 0
        %956 = vmatpush1.bf16.msra.mxu0 0
        %957 = vmatprep.subr.bf16.mxu0 0
        %958 = vmatpush1.bf16.msra.mxu0 0
        %959 = vmatprep.subr.bf16.mxu0 0
        %960 = vmatpush1.bf16.msra.mxu0 0
        %961 = vmatprep.subr.bf16.mxu0 0
        %962 = vmatpush1.bf16.msra.mxu0 0
        %963 = vmatprep.mubr.bf16.mxu0 0
        %964 = vmatmul.mubr.bf16.gmra.mrb[0].mxu0 %v875
        %v965 = vpop.f32.mrb[0].mxu0
        %v966 = vadd.f32 0.0, %v965
        %v967 = vpop.f32.mrb[0].mxu0
        %v968 = vadd.f32 0.0, %v967
        %v969 = vpop.f32.mrb[0].mxu0
        %v970 = vpop.f32.mrb[0].mxu0
        %971 = vdwg.mxu0
        %972 = vst [vmem:[%s190] sm:$0xff] %v925
        %973 = vst [vmem:[%s190 + $0x8] sm:$0xff] %v927
        %974 = vst [vmem:[%s190 + $0x10] sm:$0xff] %v966
        %975 = vst [vmem:[%s190 + $0x18] sm:$0xff] %v968
        %s976 = sand.u32 %s91, 1
        %s977 = scalar_lea.sflag [#allocation5], %s976
        %s978 = sand.u32 %s91, 1
        %s979 = smul.addr %s978, 32
        %s980 = scalar_lea.vmem [#allocation8], %s979
        // Predicated region
        $region37: #{tpu_custom_call.1} parent=27 // pred_check
          %p981 = pneg %p101
        $region38: #{tpu_custom_call.1} parent=27 // pred_check_branch
          %983 = sbr.rel (%p981) target = $region40
        $region39: #{tpu_custom_call.1} parent=27 // pred_region
          %s984 = smul.u32 4, %s25
          %s986 = ssub.s32 512, 512
          %987 = vsyncadd %s977, %s986
          %s988 = smul.addr %s24, 8
          %s989 = sadd.s32 %s984, %s988
          %s990 = smul.addr %s989, 128
          %s991 = scalar_lea.hbm %s2, %s990
          %s993 = sshll.u32 %s980, 4
          %s994 = int_to_ptr.vmem [resolvable:$true] %s993
          %996 = dma.vmem_to_hbm [thread:$0]  %s994, 512, %s991, %s977
        $region40: #{tpu_custom_call.1} parent=27 // pred_fallthru
          _
      $region28: #{tpu_custom_call.1} parent=5 // pred_fallthru
        _
      %p997 = scmp.le.s32.totalorder 2, %s15
      // Predicated region
      $region41: #{tpu_custom_call.1} parent=5 // pred_check
        %p998 = pneg %p997
      $region42: #{tpu_custom_call.1} parent=5 // pred_check_branch
        %1000 = sbr.rel (%p998) target = $region44
      $region43: #{tpu_custom_call.1} parent=5 // pred_region
        %s1001 = ssub.s32 %s15, 2
        // Predicated region
        $region45: #{tpu_custom_call.1} parent=43 // pred_check
          %p1002 = pneg %p107
        $region46: #{tpu_custom_call.1} parent=43 // pred_check_branch
          %1004 = sbr.rel (%p1002) target = $region48
        $region47: #{tpu_custom_call.1} parent=43 // pred_region
          %s1005 = sand.u32 %s92, 1
          %s1006 = scalar_lea.sflag [#allocation5], %s1005
          %s1007 = sand.u32 %s92, 1
          %s1008 = smul.addr %s1007, 32
          %s1009 = scalar_lea.vmem [#allocation8], %s1008
          %1010 = dma.done %s1006, 512
        $region48: #{tpu_custom_call.1} parent=43 // pred_fallthru
          _
      $region44: #{tpu_custom_call.1} parent=5 // pred_fallthru
        _
    $region6: #{tpu_custom_call.1} parent=1 // loop_footer
      %s19 = sadd.s32 1, %s15
    $region7: #{tpu_custom_call.1} parent=1 // loop_footer_branch
      %14 = sbr.rel target = $region3
    $region8: #{tpu_custom_call.1} parent=1 // loop_exit
      _
    %1011 = vsyncpa [#allocation4], 1
    %s1012 = scalar_lea.sflag [#allocation4], 1
    %1013 = vsyncpa %s1012, 1
    %1014 = vsyncpa [#allocation7], 1
    %1015 = vsyncpa [#allocation5], 1
    %s1016 = scalar_lea.sflag [#allocation5], 1
    %1017 = vsyncpa %s1016, 1

</llo_original>
